<compile_context>
chip_gen: v7x
topology: tpu7x:2x2x1
jax: 0.10.0
libtpu: 0.0.40
codegen_flags: <defaults>
</compile_context>

<pallas_src>
import functools

import jax
import jax.numpy as jnp
from jax import lax
from jax.experimental import pallas as pl
from jax.experimental.pallas import tpu as pltpu


def _round_up(x, m):
    return ((x + m - 1) // m) * m


def _infonce_kernel(q_ref, dkn_ref, out_ref,
                    qn_sc, pos_sc, m_sc, l_sc,
                    *, inv_temp, valid_b, block_k, need_col_mask):
    qi = pl.program_id(0)
    ki = pl.program_id(1)
    nk = pl.num_programs(1)
    eps = 1e-12

    # ---- per query-tile init (once per qi, at the first doc tile) ----
    @pl.when(ki == 0)
    def _init():
        q = q_ref[...].astype(jnp.float32)
        q_ss = jnp.sum(q * q, axis=-1, keepdims=True)
        # 1/max(||q||, eps) == rsqrt(max(||q||^2, eps^2)); fold 1/temperature in so
        # neither the sim tile nor the positive term needs a divide.
        qn = q * (lax.rsqrt(jnp.maximum(q_ss, eps * eps)) * inv_temp)
        qn_sc[...] = qn.astype(qn_sc.dtype)
        m_sc[...] = jnp.full_like(m_sc, -jnp.inf)
        l_sc[...] = jnp.zeros_like(l_sc)
        pos_sc[...] = jnp.zeros_like(pos_sc)

    qn = qn_sc[...]       # [TQ, Dp], normalized, pre-scaled by 1/T, MXU dtype
    dkn = dkn_ref[...]    # [TK, Dp], pre-normalized in the wrapper, MXU dtype

    # ---- sim tile on the MXU (contract D on both operands, f32 accumulation) ----
    sim = lax.dot_general(qn, dkn,
                          dimension_numbers=(((1,), (1,)), ((), ())),
                          preferred_element_type=jnp.float32)   # [TQ, TK] f32

    # ---- positive term: diagonal of the (ki == qi) tile, from the UNMASKED sim ----
    @pl.when(ki == qi)
    def _capture_pos():
        r = lax.broadcasted_iota(jnp.int32, sim.shape, 0)
        c = lax.broadcasted_iota(jnp.int32, sim.shape, 1)
        pos_sc[...] = jnp.sum(jnp.where(r == c, sim, 0.0), axis=-1, keepdims=True)

    # ---- online logsumexp over doc tiles ----
    def online_update(s):
        m_prev = m_sc[...]
        m_new = jnp.maximum(m_prev, jnp.max(s, axis=-1, keepdims=True))
        alpha = jnp.exp(m_prev - m_new)
        l_sc[...] = alpha * l_sc[...] + jnp.sum(jnp.exp(s - m_new), axis=-1, keepdims=True)
        m_sc[...] = m_new

    if need_col_mask:
        # Only the last doc tile contains padded columns; don't pay the iota/compare/
        # select on the other nk-1 tiles.
        @pl.when(ki != nk - 1)
        def _():
            online_update(sim)

        @pl.when(ki == nk - 1)
        def _():
            col = ki * block_k + lax.broadcasted_iota(jnp.int32, sim.shape, 1)
            online_update(jnp.where(col < valid_b, sim, -1e30))
    else:
        online_update(sim)

    # ---- finalize per-row loss on the last doc tile ----
    @pl.when(ki == nk - 1)
    def _finalize():
        out_ref[...] = m_sc[...] + jnp.log(l_sc[...]) - pos_sc[...]


def infonce_loss(query_vec, doc_vec, temperature=0.07, block=512,
                 mxu_dtype=jnp.bfloat16):
    """InfoNCE loss; query_vec/doc_vec are [B, D]. Returns scalar f32 loss.

    mxu_dtype=jnp.bfloat16 (default) streams doc keys and drives the MXU in bf16
    (f32 accumulation). Use mxu_dtype=jnp.float32 for exact parity with the reference.
    """
    B, D = query_vec.shape
    assert doc_vec.shape == (B, D)
    eps = 1e-12

    mxu_dtype = jnp.dtype(mxu_dtype)
    # bf16 packs 2 rows per sublane -> keep row tiles 16-aligned on the bf16 path.
    row_align = 8 if (query_vec.dtype.itemsize == 4 and mxu_dtype.itemsize == 4) else 16

    d_pad = _round_up(D, 128)                               # lane-dense feature dim
    t = _round_up(min(block, _round_up(B, row_align)), row_align)
    b_pad = _round_up(B, t)

    q = query_vec
    # Pre-normalize the doc ("key") side ONCE in the wrapper (in-kernel it would be
    # re-normalized B/t times) and cast to the MXU streaming dtype (halves HBM bytes
    # on the dominant dkey stream when bf16).
    d = doc_vec.astype(jnp.float32)
    dn = d * lax.rsqrt(jnp.maximum(jnp.sum(d * d, axis=-1, keepdims=True), eps * eps))
    dn = dn.astype(mxu_dtype)

    if (b_pad, d_pad) != (B, D):
        q = jnp.pad(q, ((0, b_pad - B), (0, d_pad - D)))
        dn = jnp.pad(dn, ((0, b_pad - B), (0, d_pad - D)))

    nt = b_pad // t
    grid = (nt, nt)       # (query tiles [parallel], doc tiles [arbitrary])

    kernel = functools.partial(
        _infonce_kernel,
        inv_temp=float(1.0 / temperature),
        valid_b=B,
        block_k=t,
        need_col_mask=(b_pad != B),
    )

    # Rough VMEM budget: double-buffered q + dkey streams, output, scratch, and
    # [t, t] sim/exp temporaries. Clamp: >= 32 MiB (raises v5e's 16 MiB scoped
    # default), <= 56 MiB (headroom under v7x's 64 MiB physical VMEM).
    est = (2 * t * d_pad * q.dtype.itemsize            # q stream
           + 2 * t * d_pad * dn.dtype.itemsize         # doc-key stream
           + 2 * t * 4                                 # output
           + t * d_pad * mxu_dtype.itemsize            # qn scratch
           + 4 * t * 4                                 # pos/m/l scratch
           + 6 * t * t * 4)                            # sim/exp temporaries + slack
    vmem_limit = int(min(max(2 * est, 32 * 1024 * 1024), 56 * 1024 * 1024))

    per_row = pl.pallas_call(
        kernel,
        out_shape=jax.ShapeDtypeStruct((b_pad, 1), jnp.float32),
        grid_spec=pltpu.PrefetchScalarGridSpec(
            num_scalar_prefetch=0,
            grid=grid,
            in_specs=[
                pl.BlockSpec((t, d_pad), lambda qi, ki: (qi, 0)),   # queries
                pl.BlockSpec((t, d_pad), lambda qi, ki: (ki, 0)),   # pre-normalized doc keys
            ],
            out_specs=pl.BlockSpec((t, 1), lambda qi, ki: (qi, 0)),
            scratch_shapes=[
                pltpu.VMEM((t, d_pad), mxu_dtype),     # normalized + 1/T-scaled queries
                pltpu.VMEM((t, 1), jnp.float32),       # positive (diagonal) term
                pltpu.VMEM((t, 1), jnp.float32),       # running max
                pltpu.VMEM((t, 1), jnp.float32),       # running sum
            ],
        ),
        compiler_params=pltpu.CompilerParams(
            dimension_semantics=("parallel", "arbitrary"),
            vmem_limit_bytes=vmem_limit),
    )(q, dn)

    # tiny epilogue: mean over the valid rows only
    return jnp.sum(per_row[:B, 0]) / B


def _infonce_ref(query_vec, doc_vec, temperature=0.07):
    eps = 1e-12
    q = query_vec.astype(jnp.float32)
    d = doc_vec.astype(jnp.float32)
    qn = q / jnp.maximum(jnp.linalg.norm(q, axis=1, keepdims=True), eps)
    dn = d / jnp.maximum(jnp.linalg.norm(d, axis=1, keepdims=True), eps)
    sim = qn @ dn.T / temperature
    lse = jax.scipy.special.logsumexp(sim, axis=-1)
    diag = jnp.diagonal(sim)
    return jnp.mean(lse - diag)


if __name__ == "__main__":
    key = jax.random.PRNGKey(0)
    kq, kd, kq2, kd2 = jax.random.split(key, 4)

    # test 1: single tile, exact f32 MXU path (parity with the reference).
    q1 = jax.random.normal(kq, (8, 32), dtype=jnp.float32)
    d1 = jax.random.normal(kd, (8, 32), dtype=jnp.float32)
    loss1 = infonce_loss(q1, d1, temperature=0.07, mxu_dtype=jnp.float32)
    jax.block_until_ready(loss1)
    ref1 = _infonce_ref(q1, d1, temperature=0.07)
    assert jnp.allclose(loss1, ref1, atol=2e-3, rtol=2e-3), (loss1, ref1)

    # test 2: non-aligned batch (40) with a small tile to exercise the tiled
    # online-logsumexp path, diag capture on a non-final tile, row padding and
    # last-tile-only column masking (grid = 3x3), default bf16 MXU path.
    q2 = jax.random.normal(kq2, (40, 72), dtype=jnp.float32)
    d2 = jax.random.normal(kd2, (40, 72), dtype=jnp.float32)
    loss2 = infonce_loss(q2, d2, temperature=0.07, block=16)   # bf16 default
    jax.block_until_ready(loss2)
    ref2 = _infonce_ref(q2, d2, temperature=0.07)
    assert jnp.allclose(loss2, ref2, atol=5e-2, rtol=3e-2), (loss2, ref2)

    print("KERNEL_OK")
</pallas_src>

<mosaic_0001>
module attributes {stable_mosaic.version = 11 : i64} {
  func.func @_infonce_kernel(%arg0: i32, %arg1: i32, %arg2: memref<8x128xf32, #tpu.memory_space<vmem>>, %arg3: memref<8x128xf32, #tpu.memory_space<vmem>>, %arg4: memref<8x1xf32, #tpu.memory_space<vmem>>, %arg5: memref<8x128xf32, #tpu.memory_space<vmem>>, %arg6: memref<8x1xf32, #tpu.memory_space<vmem>>, %arg7: memref<8x1xf32, #tpu.memory_space<vmem>>, %arg8: memref<8x1xf32, #tpu.memory_space<vmem>>) attributes {dimension_semantics = [#tpu.dimension_semantics<parallel>, #tpu.dimension_semantics<arbitrary>], iteration_bounds = array<i64: 1, 1>, scalar_prefetch = 0 : i64, scratch_operands = 4 : i64, tpu.core_type = #tpu.core_type<tc>, window_params = [{transform_indices = @transform_0, window_bounds = array<i64: 8, 128>}, {transform_indices = @transform_1, window_bounds = array<i64: 8, 128>}, {transform_indices = @transform_2, window_bounds = array<i64: 8, 1>}]} {
    %c0_i32 = arith.constant 0 : i32
    %0 = arith.cmpi eq, %arg1, %c0_i32 : i32
    %1 = arith.extui %0 : i1 to i32
    %c0_i32_0 = arith.constant 0 : i32
    %2 = arith.cmpi ne, %1, %c0_i32_0 : i32
    scf.if %2 {
      %c0_17 = arith.constant 0 : index
      %c0_18 = arith.constant 0 : index
      %28 = vector.load %arg2[%c0_17, %c0_18] : memref<8x128xf32, #tpu.memory_space<vmem>>, vector<8x128xf32>
      %29 = arith.mulf %28, %28 : vector<8x128xf32>
      %cst_19 = arith.constant dense<0.000000e+00> : vector<8xf32>
      %30 = vector.multi_reduction <add>, %29, %cst_19 [1] : vector<8x128xf32> to vector<8xf32>
      %31 = vector.shape_cast %30 : vector<8xf32> to vector<8x1xf32>
      %cst_20 = arith.constant 1.000000e-24 : f32
      %32 = vector.broadcast %cst_20 : f32 to vector<8x1xf32>
      %33 = arith.maximumf %31, %32 : vector<8x1xf32>
      %34 = math.rsqrt %33 : vector<8x1xf32>
      %cst_21 = arith.constant 14.2857141 : f32
      %35 = vector.broadcast %cst_21 : f32 to vector<8x1xf32>
      %36 = arith.mulf %34, %35 : vector<8x1xf32>
      %37 = vector.broadcast %36 : vector<8x1xf32> to vector<8x128xf32>
      %38 = arith.mulf %28, %37 : vector<8x128xf32>
      %c0_22 = arith.constant 0 : index
      %c0_23 = arith.constant 0 : index
      %39 = vector.load %arg5[%c0_22, %c0_23] : memref<8x128xf32, #tpu.memory_space<vmem>>, vector<8x128xf32>
      tpu.vector_store %arg5[%c0_22, %c0_23], %38 {strides = array<i32>} : memref<8x128xf32, #tpu.memory_space<vmem>>, vector<8x128xf32>,
      %cst_24 = arith.constant 0xFF800000 : f32
      %40 = vector.broadcast %cst_24 : f32 to vector<8x1xf32>
      %c0_25 = arith.constant 0 : index
      %c0_26 = arith.constant 0 : index
      %41 = vector.load %arg7[%c0_25, %c0_26] : memref<8x1xf32, #tpu.memory_space<vmem>>, vector<8x1xf32>
      tpu.vector_store %arg7[%c0_25, %c0_26], %40 {strides = array<i32>} : memref<8x1xf32, #tpu.memory_space<vmem>>, vector<8x1xf32>,
      %cst_27 = arith.constant 0.000000e+00 : f32
      %42 = vector.broadcast %cst_27 : f32 to vector<8x1xf32>
      %c0_28 = arith.constant 0 : index
      %c0_29 = arith.constant 0 : index
      %43 = vector.load %arg8[%c0_28, %c0_29] : memref<8x1xf32, #tpu.memory_space<vmem>>, vector<8x1xf32>
      tpu.vector_store %arg8[%c0_28, %c0_29], %42 {strides = array<i32>} : memref<8x1xf32, #tpu.memory_space<vmem>>, vector<8x1xf32>,
      %cst_30 = arith.constant 0.000000e+00 : f32
      %44 = vector.broadcast %cst_30 : f32 to vector<8x1xf32>
      %c0_31 = arith.constant 0 : index
      %c0_32 = arith.constant 0 : index
      %45 = vector.load %arg6[%c0_31, %c0_32] : memref<8x1xf32, #tpu.memory_space<vmem>>, vector<8x1xf32>
      tpu.vector_store %arg6[%c0_31, %c0_32], %44 {strides = array<i32>} : memref<8x1xf32, #tpu.memory_space<vmem>>, vector<8x1xf32>,
    } else {
    }
    %c0 = arith.constant 0 : index
    %c0_1 = arith.constant 0 : index
    %3 = vector.load %arg5[%c0, %c0_1] : memref<8x128xf32, #tpu.memory_space<vmem>>, vector<8x128xf32>
    %c0_2 = arith.constant 0 : index
    %c0_3 = arith.constant 0 : index
    %4 = vector.load %arg3[%c0_2, %c0_3] : memref<8x128xf32, #tpu.memory_space<vmem>>, vector<8x128xf32>
    %cst = arith.constant dense<0.000000e+00> : vector<8x8xf32>
    %5 = tpu.matmul %3, %4, %cst {dimension_numbers = #tpu.dot_dimension_numbers<[1], [1], [0], [0], [0, 0, 1, 0], [], []>} : vector<8x128xf32>, vector<8x128xf32>, vector<8x8xf32> -> vector<8x8xf32>
    %6 = arith.cmpi eq, %arg1, %arg0 : i32
    %7 = arith.extui %6 : i1 to i32
    %c0_i32_4 = arith.constant 0 : i32
    %8 = arith.cmpi ne, %7, %c0_i32_4 : i32
    scf.if %8 {
      %28 = tpu.iota {dimensions = array<i32: 0>} : vector<8x8xi32>
      %29 = tpu.iota {dimensions = array<i32: 1>} : vector<8x8xi32>
      %30 = arith.cmpi eq, %28, %29 : vector<8x8xi32>
      %cst_17 = arith.constant 0.000000e+00 : f32
      %31 = vector.broadcast %cst_17 : f32 to vector<8x8xf32>
      %32 = arith.select %30, %5, %31 : vector<8x8xi1>, vector<8x8xf32>
      %cst_18 = arith.constant dense<0.000000e+00> : vector<8xf32>
      %33 = vector.multi_reduction <add>, %32, %cst_18 [1] : vector<8x8xf32> to vector<8xf32>
      %34 = vector.shape_cast %33 : vector<8xf32> to vector<8x1xf32>
      %c0_19 = arith.constant 0 : index
      %c0_20 = arith.constant 0 : index
      %35 = vector.load %arg6[%c0_19, %c0_20] : memref<8x1xf32, #tpu.memory_space<vmem>>, vector<8x1xf32>
      tpu.vector_store %arg6[%c0_19, %c0_20], %34 {strides = array<i32>} : memref<8x1xf32, #tpu.memory_space<vmem>>, vector<8x1xf32>,
    } else {
    }
    %c0_5 = arith.constant 0 : index
    %c0_6 = arith.constant 0 : index
    %9 = vector.load %arg7[%c0_5, %c0_6] : memref<8x1xf32, #tpu.memory_space<vmem>>, vector<8x1xf32>
    %cst_7 = arith.constant dense<0xFF800000> : vector<8xf32>
    %10 = vector.multi_reduction <maximumf>, %5, %cst_7 [1] : vector<8x8xf32> to vector<8xf32>
    %11 = vector.shape_cast %10 : vector<8xf32> to vector<8x1xf32>
    %12 = arith.maximumf %9, %11 : vector<8x1xf32>
    %13 = arith.subf %9, %12 : vector<8x1xf32>
    %14 = math.exp %13 : vector<8x1xf32>
    %c0_8 = arith.constant 0 : index
    %c0_9 = arith.constant 0 : index
    %15 = vector.load %arg8[%c0_8, %c0_9] : memref<8x1xf32, #tpu.memory_space<vmem>>, vector<8x1xf32>
    %16 = arith.mulf %14, %15 : vector<8x1xf32>
    %17 = vector.broadcast %12 : vector<8x1xf32> to vector<8x8xf32>
    %18 = arith.subf %5, %17 : vector<8x8xf32>
    %19 = math.exp %18 : vector<8x8xf32>
    %cst_10 = arith.constant dense<0.000000e+00> : vector<8xf32>
    %20 = vector.multi_reduction <add>, %19, %cst_10 [1] : vector<8x8xf32> to vector<8xf32>
    %21 = vector.shape_cast %20 : vector<8xf32> to vector<8x1xf32>
    %22 = arith.addf %16, %21 : vector<8x1xf32>
    %c0_11 = arith.constant 0 : index
    %c0_12 = arith.constant 0 : index
    %23 = vector.load %arg8[%c0_11, %c0_12] : memref<8x1xf32, #tpu.memory_space<vmem>>, vector<8x1xf32>
    tpu.vector_store %arg8[%c0_11, %c0_12], %22 {strides = array<i32>} : memref<8x1xf32, #tpu.memory_space<vmem>>, vector<8x1xf32>,
    %c0_13 = arith.constant 0 : index
    %c0_14 = arith.constant 0 : index
    %24 = vector.load %arg7[%c0_13, %c0_14] : memref<8x1xf32, #tpu.memory_space<vmem>>, vector<8x1xf32>
    tpu.vector_store %arg7[%c0_13, %c0_14], %12 {strides = array<i32>} : memref<8x1xf32, #tpu.memory_space<vmem>>, vector<8x1xf32>,
    %c0_i32_15 = arith.constant 0 : i32
    %25 = arith.cmpi eq, %arg1, %c0_i32_15 : i32
    %26 = arith.extui %25 : i1 to i32
    %c0_i32_16 = arith.constant 0 : i32
    %27 = arith.cmpi ne, %26, %c0_i32_16 : i32
    scf.if %27 {
      %c0_17 = arith.constant 0 : index
      %c0_18 = arith.constant 0 : index
      %28 = vector.load %arg7[%c0_17, %c0_18] : memref<8x1xf32, #tpu.memory_space<vmem>>, vector<8x1xf32>
      %c0_19 = arith.constant 0 : index
      %c0_20 = arith.constant 0 : index
      %29 = vector.load %arg8[%c0_19, %c0_20] : memref<8x1xf32, #tpu.memory_space<vmem>>, vector<8x1xf32>
      %30 = math.log %29 : vector<8x1xf32>
      %31 = arith.addf %28, %30 : vector<8x1xf32>
      %c0_21 = arith.constant 0 : index
      %c0_22 = arith.constant 0 : index
      %32 = vector.load %arg6[%c0_21, %c0_22] : memref<8x1xf32, #tpu.memory_space<vmem>>, vector<8x1xf32>
      %33 = arith.subf %31, %32 : vector<8x1xf32>
      %c0_23 = arith.constant 0 : index
      %c0_24 = arith.constant 0 : index
      %34 = vector.load %arg4[%c0_23, %c0_24] : memref<8x1xf32, #tpu.memory_space<vmem>>, vector<8x1xf32>
      tpu.vector_store %arg4[%c0_23, %c0_24], %33 {strides = array<i32>} : memref<8x1xf32, #tpu.memory_space<vmem>>, vector<8x1xf32>,
    } else {
    }
    return
  }
  func.func @transform_0(%arg0: i32, %arg1: i32) -> (i32, i32) {
    %c0_i32 = arith.constant 0 : i32
    %c0_i32_0 = arith.constant 0 : i32
    return %arg0, %c0_i32 : i32, i32
  }
  func.func @transform_1(%arg0: i32, %arg1: i32) -> (i32, i32) {
    %c0_i32 = arith.constant 0 : i32
    %c0_i32_0 = arith.constant 0 : i32
    return %arg1, %c0_i32 : i32, i32
  }
  func.func @transform_2(%arg0: i32, %arg1: i32) -> (i32, i32) {
    %c0_i32 = arith.constant 0 : i32
    %c0_i32_0 = arith.constant 0 : i32
    return %arg0, %c0_i32 : i32, i32
  }
}

</mosaic_0001>

<llo_original>
// kernel: tpu_custom_call.1
$region0: #{tpu_custom_call.1}
  #allocation0 [shape = 'u32[]', space=smem, size = 0x4, offset = 0x4, fixed_abs, tag = 'smem constant byte address 0x4 - core index']
  #allocation1 [shape = 'u32[144,128]{1,0:T(1,128)}', space=vmem, size = 0x12000, scoped, tag = 'internal scratch']
  #allocation2 [shape = 'f32[8,128]{1,0:T(8,128)}', space=vmem, size = 0x1000, scoped, tag = 'scratch operand']
  #allocation3 [shape = 'f32[8,1]{1,0:T(8,128)}', space=vmem, size = 0x1000, scoped, tag = 'scratch operand']
  #allocation4 [shape = 'f32[8,1]{1,0:T(8,128)}', space=vmem, size = 0x1000, scoped, tag = 'scratch operand']
  #allocation5 [shape = 'f32[8,1]{1,0:T(8,128)}', space=vmem, size = 0x1000, scoped, tag = 'scratch operand']
  %s0 = inlined_call_operand.hbm [shape: f32[8,128], index: 0, kind: input, shape index: {}]
  %s1 = inlined_call_operand.hbm [shape: f32[8,128], index: 1, kind: input, shape index: {}]
  %s2 = inlined_call_operand.vmem [shape: f32[8,1], index: 2, kind: output, shape index: {}]
  %s3 = sld [smem:[#allocation0]]
  $region38: #{tpu_custom_call.1} parent=0
    _
  %s5 = ssub.s32 1, %s3
  %s6 = scalar_select 0, %s5, %s3
  $region1: #{tpu_custom_call.1} parent=0
    #allocation6 [shape = 'u8[4096]{0}', space=vmem, size = 0x1000, scoped, tag = 'input window, operand 0, single buffered']
    #allocation7 [shape = 's32[1]{0}', space=sflag, size = 0x4, scoped, tag = 'scoped memory for tpu_custom_call.1']
    #allocation8 [shape = 'u8[4096]{0}', space=vmem, size = 0x1000, scoped, tag = 'input window, operand 1, single buffered']
    #allocation9 [shape = 's32[1]{0}', space=sflag, size = 0x4, scoped, tag = 'scoped memory for tpu_custom_call.1']
    %7 = vsyncpa [#allocation7], 0
    %8 = vsyncpa [#allocation9], 0
    // Predicated region
    $region2: #{tpu_custom_call.1} parent=1 // pred_check
      _
    $region3: #{tpu_custom_call.1} parent=1 // pred_check_branch
      %10 = sbr.rel (0) target = $region5
    $region4: #{tpu_custom_call.1} parent=1 // pred_region
      %s12 = ssub.s32 128, 128
      %13 = vsyncadd [#allocation7], %s12
      %s15 = sshll.u32 [#allocation6], 4
      %s16 = int_to_ptr.vmem [resolvable:$true] %s15
      %18 = dma.hbm_to_vmem [thread:$0]  %s0, 128, %s16, [#allocation7]
    $region5: #{tpu_custom_call.1} parent=1 // pred_fallthru
      _
    // Predicated region
    $region6: #{tpu_custom_call.1} parent=1 // pred_check
      _
    $region7: #{tpu_custom_call.1} parent=1 // pred_check_branch
      %20 = sbr.rel (0) target = $region9
    $region8: #{tpu_custom_call.1} parent=1 // pred_region
      %s22 = ssub.s32 128, 128
      %23 = vsyncadd [#allocation9], %s22
      %s25 = sshll.u32 [#allocation8], 4
      %s26 = int_to_ptr.vmem [resolvable:$true] %s25
      %28 = dma.hbm_to_vmem [thread:$0]  %s1, 128, %s26, [#allocation9]
    $region9: #{tpu_custom_call.1} parent=1 // pred_fallthru
      _
    // Predicated region
    $region10: #{tpu_custom_call.1} parent=1 // pred_check
      _
    $region11: #{tpu_custom_call.1} parent=1 // pred_check_branch
      %30 = sbr.rel (0) target = $region13
    $region12: #{tpu_custom_call.1} parent=1 // pred_region
      %31 = dma.done [#allocation7], 128
    $region13: #{tpu_custom_call.1} parent=1 // pred_fallthru
      _
    // Predicated region
    $region14: #{tpu_custom_call.1} parent=1 // pred_check
      _
    $region15: #{tpu_custom_call.1} parent=1 // pred_check_branch
      %33 = sbr.rel (0) target = $region17
    $region16: #{tpu_custom_call.1} parent=1 // pred_region
      %34 = dma.done [#allocation9], 128
    $region17: #{tpu_custom_call.1} parent=1 // pred_fallthru
      _
    %p35 = scmp.eq.s32.totalorder 0, 0
    // Predicated region
    $region18: #{tpu_custom_call.1} parent=1 // pred_check
      %p36 = pneg %p35
    $region19: #{tpu_custom_call.1} parent=1 // pred_check_branch
      %38 = sbr.rel (%p36) target = $region21
    $region20: #{tpu_custom_call.1} parent=1 // pred_region
      %v39 = vld [vmem:[#allocation6] sm:$0xff]
      %v40 = vmul.f32 %v39, %v39
      %41 = vadd.xlane.f32.xlu0 %v40
      %v42 = vpop.xlane.xlu0 %41
      %v43 = vmax.f32 %v42, 1e-24
      %v44 = vrsqrt.pop %v43
      %v45 = vmul.f32 %v44, 14.285714
      %v46 = vmul.f32 %v39, %v45
      %47 = vst [vmem:[#allocation2] sm:$0xff] %v46
      %vm48 = vcmask 7168
      %49 = vst.msk [vmem:[#allocation4] sm:$0xff] %vm48, -inf
      %50 = vst.msk [vmem:[#allocation5] sm:$0xff] %vm48, 0.0
      %51 = vst.msk [vmem:[#allocation3] sm:$0xff] %vm48, 0.0
    $region21: #{tpu_custom_call.1} parent=1 // pred_fallthru
      _
    %v52 = vld [vmem:[#allocation2] sm:$0xff]
    %v53 = vld [vmem:[#allocation8] sm:$0xff]
    %54 = vmatprep.subr.mxu0 0.0
    %55 = vmatpush1.xpose.msra.mxu0 %v53
    %56 = vmatprep.subr.mxu0 0.0
    %57 = vmatpush1.xpose.msra.mxu0 0.0
    %58 = vmatprep.subr.mxu0 0.0
    %59 = vmatpush1.xpose.msra.mxu0 0.0
    %60 = vmatprep.subr.mxu0 0.0
    %61 = vmatpush1.xpose.msra.mxu0 0.0
    %62 = vmatprep.subr.mxu0 0.0
    %63 = vmatpush1.xpose.msra.mxu0 0.0
    %64 = vmatprep.subr.mxu0 0.0
    %65 = vmatpush1.xpose.msra.mxu0 0.0
    %66 = vmatprep.subr.mxu0 0.0
    %67 = vmatpush1.xpose.msra.mxu0 0.0
    %68 = vmatprep.subr.mxu0 0.0
    %69 = vmatpush1.xpose.msra.mxu0 0.0
    %70 = vmatprep.subr.mxu0 0.0
    %71 = vmatpush1.xpose.msra.mxu0 0.0
    %72 = vmatprep.subr.mxu0 0.0
    %73 = vmatpush1.xpose.msra.mxu0 0.0
    %74 = vmatprep.subr.mxu0 0.0
    %75 = vmatpush1.xpose.msra.mxu0 0.0
    %76 = vmatprep.subr.mxu0 0.0
    %77 = vmatpush1.xpose.msra.mxu0 0.0
    %78 = vmatprep.subr.mxu0 0.0
    %79 = vmatpush1.xpose.msra.mxu0 0.0
    %80 = vmatprep.subr.mxu0 0.0
    %81 = vmatpush1.xpose.msra.mxu0 0.0
    %82 = vmatprep.subr.mxu0 0.0
    %83 = vmatpush1.xpose.msra.mxu0 0.0
    %84 = vmatprep.subr.mxu0 0.0
    %85 = vmatpush1.xpose.msra.mxu0 0.0
    %86 = vmatprep.subr.mxu0 0.0
    %87 = vmatpush1.xpose.msra.mxu0 0.0
    %88 = vmatprep.subr.mxu0 0.0
    %89 = vmatpush1.xpose.msra.mxu0 0.0
    %90 = vmatprep.subr.mxu0 0.0
    %91 = vmatpush1.xpose.msra.mxu0 0.0
    %92 = vmatprep.subr.mxu0 0.0
    %93 = vmatpush1.xpose.msra.mxu0 0.0
    %94 = vmatprep.subr.mxu0 0.0
    %95 = vmatpush1.xpose.msra.mxu0 0.0
    %96 = vmatprep.subr.mxu0 0.0
    %97 = vmatpush1.xpose.msra.mxu0 0.0
    %98 = vmatprep.subr.mxu0 0.0
    %99 = vmatpush1.xpose.msra.mxu0 0.0
    %100 = vmatprep.subr.mxu0 0.0
    %101 = vmatpush1.xpose.msra.mxu0 0.0
    %102 = vmatprep.subr.mxu0 0.0
    %103 = vmatpush1.xpose.msra.mxu0 0.0
    %104 = vmatprep.subr.mxu0 0.0
    %105 = vmatpush1.xpose.msra.mxu0 0.0
    %106 = vmatprep.subr.mxu0 0.0
    %107 = vmatpush1.xpose.msra.mxu0 0.0
    %108 = vmatprep.subr.mxu0 0.0
    %109 = vmatpush1.xpose.msra.mxu0 0.0
    %110 = vmatprep.subr.mxu0 0.0
    %111 = vmatpush1.xpose.msra.mxu0 0.0
    %112 = vmatprep.subr.mxu0 0.0
    %113 = vmatpush1.xpose.msra.mxu0 0.0
    %114 = vmatprep.subr.mxu0 0.0
    %115 = vmatpush1.xpose.msra.mxu0 0.0
    %116 = vmatprep.subr.mxu0 0.0
    %117 = vmatpush1.xpose.msra.mxu0 0.0
    %118 = vmatprep.mubr.f32.mxu0 0.0
    %119 = vmatmul.mubr.f32.gmra.mrb[0].mxu0 %v52
    %v120 = vpop.f32.mrb[0].mxu0
    %v121 = vadd.f32 0.0, %v120
    %v122 = vpop.f32.mrb[0].mxu0
    %123 = vdwg.mxu0
    %p124 = scmp.eq.s32.totalorder 0, 0
    // Predicated region
    $region22: #{tpu_custom_call.1} parent=1 // pred_check
      %p125 = pneg %p124
    $region23: #{tpu_custom_call.1} parent=1 // pred_check_branch
      %127 = sbr.rel (%p125) target = $region25
    $region24: #{tpu_custom_call.1} parent=1 // pred_region
      %v128 = vlaneseq
      %v129 = vshrl.u32 %v128, 7
      %v130 = vlaneseq
      %v131 = vand.u32 %v130, 127
      %vm132 = vcmp.eq.s32.totalorder %v129, %v131
      %v133 = vsel %vm132, %v121, 0.0
      %vm134 = vcmask 64512
      %v135 = vsel %vm134, %v133, 0.0
      %136 = vadd.xlane.f32.xlu0 %v135
      %v137 = vpop.xlane.xlu0 %136
      %vm138 = vcmask 7168
      %139 = vst.msk [vmem:[#allocation3] sm:$0xff] %vm138, %v137
    $region25: #{tpu_custom_call.1} parent=1 // pred_fallthru
      _
    %v140 = vld [vmem:[#allocation4] sm:$0xff]
    %vm141 = vcmask 64512
    %v142 = vsel %vm141, %v121, -inf
    %143 = vmax.xlane.f32.xlu0 %v142
    %v144 = vpop.xlane.xlu0 %143
    %v145 = vmax.f32 %v140, %v144
    %v146 = vsub.f32 %v140, %v145
    %v147 = vmul.f32 %v146, 1.442695
    %v148 = vpow.pop %v147
    %v149 = vld [vmem:[#allocation5] sm:$0xff]
    %v150 = vmul.f32 %v148, %v149
    %152 = vset.pattern.permute.xlu0 0
    %153 = vperm.xlu0 %152, %v145
    %v154 = vpop.permute.xlu0 %153
    %v156 = vsub.f32 %v121, %v154
    %v157 = vmul.f32 %v156, 1.442695
    %v158 = vpow.pop %v157
    %v159 = vsel %vm141, %v158, 0.0
    %160 = vadd.xlane.f32.xlu0 %v159
    %v161 = vpop.xlane.xlu0 %160
    %v162 = vadd.f32 %v150, %v161
    %vm163 = vcmask 7168
    %164 = vst.msk [vmem:[#allocation5] sm:$0xff] %vm163, %v162
    %165 = vst.msk [vmem:[#allocation4] sm:$0xff] %vm163, %v145
    // Predicated region
    $region26: #{tpu_custom_call.1} parent=1 // pred_check
      %p166 = pneg %p35
    $region27: #{tpu_custom_call.1} parent=1 // pred_check_branch
      %168 = sbr.rel (%p166) target = $region29
    $region28: #{tpu_custom_call.1} parent=1 // pred_region
      %v169 = vld [vmem:[#allocation4] sm:$0xff]
      %v170 = vld [vmem:[#allocation5] sm:$0xff]
      %v171 = vlog2.pop %v170
      %v172 = vmul.f32 %v171, 0.6931472
      %v173 = vadd.f32 %v169, %v172
      %v174 = vld [vmem:[#allocation3] sm:$0xff]
      %v175 = vsub.f32 %v173, %v174
      %176 = vst.msk [vmem:[%s2] sm:$0xff] %vm163, %v175
    $region29: #{tpu_custom_call.1} parent=1 // pred_fallthru
      _
    // Predicated region
    $region30: #{tpu_custom_call.1} parent=1 // pred_check
      _
    $region31: #{tpu_custom_call.1} parent=1 // pred_check_branch
      %178 = sbr.rel (0) target = $region33
    $region32: #{tpu_custom_call.1} parent=1 // pred_region
      _
    $region33: #{tpu_custom_call.1} parent=1 // pred_fallthru
      _
    // Predicated region
    $region34: #{tpu_custom_call.1} parent=1 // pred_check
      _
    $region35: #{tpu_custom_call.1} parent=1 // pred_check_branch
      %180 = sbr.rel (0) target = $region37
    $region36: #{tpu_custom_call.1} parent=1 // pred_region
      _
    $region37: #{tpu_custom_call.1} parent=1 // pred_fallthru
      _
    %181 = vsyncpa [#allocation7], 1
    %182 = vsyncpa [#allocation9], 1

</llo_original>
